<compile_context>
chip_gen: v7x
topology: tpu7x:2x2x1
jax: 0.10.0
libtpu: 0.0.40
codegen_flags: <defaults>
</compile_context>

<pallas_src>
import jax
import jax.numpy as jnp
from jax import lax
from jax.experimental import pallas as pl
from jax.experimental.pallas import tpu as pltpu

BN_EPS = 1e-5
LRELU_SLOPE = 0.2


def _round_up(x, m):
    return (x + m - 1) // m * m


# --------------------------------------------------------------------------------------
# Pass 1: conv-as-matmul + per-tile BN partial sums
# --------------------------------------------------------------------------------------
def _conv_stats_kernel(p_ref, w_ref, y_ref, s_ref, ss_ref):
    # p_ref: (TM, Kp) bf16   w_ref: (Kp, Cp) bf16 (resident across the grid)
    # y_ref: (TM, Cp) f32    s_ref/ss_ref: (1, 8, Cp) f32 per-tile partials
    y = jnp.dot(p_ref[...], w_ref[...], preferred_element_type=jnp.float32)
    y_ref[...] = y
    s = jnp.sum(y, axis=0, keepdims=True)            # (1, Cp) f32
    ss = jnp.sum(y * y, axis=0, keepdims=True)       # (1, Cp) f32
    # Replicate over the 8 sublanes so the partial-sum output block stays (8,128)-legal.
    s_ref[...] = jnp.broadcast_to(s[:, None, :], s_ref.shape)
    ss_ref[...] = jnp.broadcast_to(ss[:, None, :], ss_ref.shape)


# --------------------------------------------------------------------------------------
# Pass 2: BatchNorm apply (global batch stats folded into scale/shift) + LeakyReLU(0.2)
# --------------------------------------------------------------------------------------
def _bn_lrelu_kernel(y_ref, scale_ref, shift_ref, o_ref):
    z = y_ref[...] * scale_ref[...] + shift_ref[...]     # f32 elementwise (v5e-friendly)
    o_ref[...] = jnp.where(z > 0, z, LRELU_SLOPE * z)


# --------------------------------------------------------------------------------------
# im2col for a 4x4 / stride-2 / pad-1 conv (NHWC bf16 input -> (M, 16*Cin) bf16)
# --------------------------------------------------------------------------------------
def _im2col_4x4_s2_p1(x_nhwc):
    # TODO(synk): fuse the overlapping 4x4/s2 window extraction into the Pallas pipeline
    # (needs element-offset / overlapping input blocks) so the patches array never hits HBM.
    N, H, W, C = x_nhwc.shape
    Ho, Wo = H // 2, W // 2
    xp = jnp.pad(x_nhwc, ((0, 0), (1, 1), (1, 1), (0, 0)))
    taps = []
    for kh in range(4):
        for kw in range(4):
            taps.append(xp[:, kh:kh + 2 * Ho:2, kw:kw + 2 * Wo:2, :])   # (N,Ho,Wo,C)
    patches = jnp.stack(taps, axis=3)                                    # (N,Ho,Wo,16,C)
    return patches.reshape(N * Ho * Wo, 16 * C), (N, Ho, Wo)


def _pick_tm(M, Kp, Cp, vmem_block_budget=14 * 1024 * 1024):
    """Largest M tile whose double-buffered pass-1/pass-2 blocks fit the VMEM budget."""
    per_row = 4 * Kp + 8 * Cp                 # 2x bf16 patch bufs + 2x f32 y bufs, bytes/row
    fixed = 4 * Kp * Cp + 2 * 2 * 8 * Cp * 4  # weight block (2 bufs) + stat partials
    tm = (vmem_block_budget - fixed) // per_row
    tm = max(8, min(4096, tm))
    tm = min(tm, _round_up(M, 8))
    tm = max(8, (tm // 8) * 8)                # second-minor dim must be a multiple of 8
    return int(tm)


@jax.jit
def unet_down_forward(x_nchw, w_oihw, gamma, beta):
    """x_nchw: [N, Cin, H, W]; w_oihw: [Cout, Cin, 4, 4]; gamma/beta: [Cout] -> NCHW out."""
    N, Cin, H, W = x_nchw.shape
    Cout = w_oihw.shape[0]

    # bf16 im2col (conv operands are bf16 anyway -> identical numerics, half the traffic).
    x_nhwc = jnp.transpose(x_nchw, (0, 2, 3, 1)).astype(jnp.bfloat16)
    patches, (n, ho, wo) = _im2col_4x4_s2_p1(x_nhwc)
    M, K = patches.shape

    # Lane-dense / MXU-friendly padding and adaptive M tiling.
    Kp = _round_up(K, 128)
    Cp = _round_up(Cout, 128)
    TM = _pick_tm(M, Kp, Cp)
    Mp = _round_up(M, TM)
    n_tiles = Mp // TM

    # Zero padding is exact for the conv and contributes zero to the BN sums, so
    # dividing by the true M keeps the statistics identical to PyTorch.
    patches_p = jnp.pad(patches, ((0, Mp - M), (0, Kp - K)))
    w_mat = jnp.transpose(w_oihw, (2, 3, 1, 0)).reshape(K, Cout).astype(jnp.bfloat16)
    w_p = jnp.pad(w_mat, ((0, Kp - K), (0, Cp - Cout)))

    cparams = pltpu.CompilerParams(
        dimension_semantics=("parallel",),          # M tiles independent -> megacore-safe
        vmem_limit_bytes=32 * 1024 * 1024,          # safe on v5e/v6e/v7x for these tiles
    )

    flops1 = 2 * Mp * Kp * Cp
    bytes1 = (Mp * Kp * 2 + Kp * Cp * 2 + Mp * Cp * 4 + 2 * n_tiles * 8 * Cp * 4)
    y_flat, psum, psumsq = pl.pallas_call(
        _conv_stats_kernel,
        grid=(n_tiles,),
        in_specs=[
            pl.BlockSpec((TM, Kp), lambda i: (i, 0)),
            pl.BlockSpec((Kp, Cp), lambda i: (0, 0)),
        ],
        out_specs=[
            pl.BlockSpec((TM, Cp), lambda i: (i, 0)),
            pl.BlockSpec((1, 8, Cp), lambda i: (i, 0, 0)),
            pl.BlockSpec((1, 8, Cp), lambda i: (i, 0, 0)),
        ],
        out_shape=[
            jax.ShapeDtypeStruct((Mp, Cp), jnp.float32),
            jax.ShapeDtypeStruct((n_tiles, 8, Cp), jnp.float32),
            jax.ShapeDtypeStruct((n_tiles, 8, Cp), jnp.float32),
        ],
        compiler_params=cparams,
        cost_estimate=pl.CostEstimate(flops=flops1, transcendentals=0,
                                      bytes_accessed=bytes1),
    )(patches_p, w_p)

    # Global training-mode batch stats (reduction over all M rows == (N,H,W) in PyTorch);
    # only [n_tiles, Cp]-sized partials cross the tile boundary -> tiny XLA math here.
    tile_sum = psum[:, 0, :]                                   # (n_tiles, Cp)
    tile_ssq = psumsq[:, 0, :]
    mean = jnp.sum(tile_sum, axis=0) / float(M)
    var = jnp.maximum(jnp.sum(tile_ssq, axis=0) / float(M) - mean * mean, 0.0)
    inv_std = lax.rsqrt(var + BN_EPS)
    gamma_p = jnp.pad(gamma.astype(jnp.float32), (0, Cp - Cout))
    beta_p = jnp.pad(beta.astype(jnp.float32), (0, Cp - Cout))
    scale = (gamma_p * inv_std).reshape(1, Cp)
    shift = (beta_p - mean * gamma_p * inv_std).reshape(1, Cp)

    flops2 = 3 * Mp * Cp
    bytes2 = 2 * Mp * Cp * 4 + 2 * Cp * 4
    out_flat = pl.pallas_call(
        _bn_lrelu_kernel,
        grid=(n_tiles,),
        in_specs=[
            pl.BlockSpec((TM, Cp), lambda i: (i, 0)),
            pl.BlockSpec((1, Cp), lambda i: (0, 0)),
            pl.BlockSpec((1, Cp), lambda i: (0, 0)),
        ],
        out_specs=pl.BlockSpec((TM, Cp), lambda i: (i, 0)),
        out_shape=jax.ShapeDtypeStruct((Mp, Cp), jnp.float32),
        # y_flat has no further consumers -> reuse its HBM buffer for the output.
        input_output_aliases={0: 0},
        compiler_params=cparams,
        cost_estimate=pl.CostEstimate(flops=flops2, transcendentals=0,
                                      bytes_accessed=bytes2),
    )(y_flat, scale, shift)

    out_nhwc = out_flat[:M, :Cout].reshape(n, ho, wo, Cout)
    # One XLA transpose back to the module's NCHW contract (keep NHWC if chained).
    return jnp.transpose(out_nhwc, (0, 3, 1, 2))


# --------------------------------------------------------------------------------------
# Pure-JAX reference mirroring PyTorch semantics (training-mode BN, biased variance).
# --------------------------------------------------------------------------------------
def unet_down_reference(x_nchw, w_oihw, gamma, beta, conv_dtype=jnp.float32):
    y = lax.conv_general_dilated(
        x_nchw.astype(conv_dtype), w_oihw.astype(conv_dtype),
        window_strides=(2, 2), padding=((1, 1), (1, 1)),
        dimension_numbers=("NCHW", "OIHW", "NCHW"),
        preferred_element_type=jnp.float32)
    mean = jnp.mean(y, axis=(0, 2, 3), keepdims=True)
    var = jnp.mean((y - mean) ** 2, axis=(0, 2, 3), keepdims=True)
    y = (y - mean) * lax.rsqrt(var + BN_EPS)
    y = y * gamma.reshape(1, -1, 1, 1) + beta.reshape(1, -1, 1, 1)
    return jnp.where(y > 0, y, LRELU_SLOPE * y)


if __name__ == "__main__":
    # Small shapes consistent with UNetDown(in_size=4, out_size=8)
    N, Cin, H, W, Cout = 2, 4, 16, 16, 8

    key = jax.random.PRNGKey(0)
    kx, kw = jax.random.split(key)
    x = jax.random.normal(kx, (N, Cin, H, W), dtype=jnp.float32)
    w = 0.02 * jax.random.normal(kw, (Cout, Cin, 4, 4), dtype=jnp.float32)  # no bias
    gamma = jnp.ones((Cout,), dtype=jnp.float32)   # BN affine at PyTorch init
    beta = jnp.zeros((Cout,), dtype=jnp.float32)

    out = unet_down_forward(x, w, gamma, beta)
    jax.block_until_ready(out)
    assert out.shape == (N, Cout, H // 2, W // 2)

    # Tight check vs a reference with matching bf16 conv-operand precision (f32 accumulate).
    ref_bf16 = unet_down_reference(x, w, gamma, beta, conv_dtype=jnp.bfloat16)
    assert jnp.allclose(out, ref_bf16, atol=3e-3, rtol=3e-3), \
        float(jnp.max(jnp.abs(out - ref_bf16)))

    # Loose sanity check vs the full-f32 PyTorch-semantics reference (bf16 quantization only).
    ref_f32 = unet_down_reference(x, w, gamma, beta, conv_dtype=jnp.float32)
    assert jnp.allclose(out, ref_f32, atol=1e-1, rtol=1e-1)

    print("KERNEL_OK")
</pallas_src>

<mosaic_0001>
module attributes {stable_mosaic.version = 11 : i64} {
  func.func @_conv_stats_kernel(%arg0: i32, %arg1: memref<128x128xbf16, #tpu.memory_space<vmem>>, %arg2: memref<128x128xbf16, #tpu.memory_space<vmem>>, %arg3: memref<128x128xf32, #tpu.memory_space<vmem>>, %arg4: memref<1x8x128xf32, #tpu.memory_space<vmem>>, %arg5: memref<1x8x128xf32, #tpu.memory_space<vmem>>) attributes {dimension_semantics = [#tpu.dimension_semantics<parallel>], iteration_bounds = array<i64: 1>, scalar_prefetch = 0 : i64, scratch_operands = 0 : i64, tpu.core_type = #tpu.core_type<tc>, window_params = [{transform_indices = @transform_0, window_bounds = array<i64: 128, 128>}, {pipeline_mode = #tpu.pipeline_mode<synchronous>, transform_indices = @transform_1, window_bounds = array<i64: 128, 128>}, {transform_indices = @transform_2, window_bounds = array<i64: 128, 128>}, {transform_indices = @transform_3, window_bounds = array<i64: 1, 8, 128>}, {transform_indices = @transform_4, window_bounds = array<i64: 1, 8, 128>}]} {
    %c0 = arith.constant 0 : index
    %c0_0 = arith.constant 0 : index
    %0 = vector.load %arg1[%c0, %c0_0] : memref<128x128xbf16, #tpu.memory_space<vmem>>, vector<128x128xbf16>
    %c0_1 = arith.constant 0 : index
    %c0_2 = arith.constant 0 : index
    %1 = vector.load %arg2[%c0_1, %c0_2] : memref<128x128xbf16, #tpu.memory_space<vmem>>, vector<128x128xbf16>
    %cst = arith.constant dense<0.000000e+00> : vector<128x128xf32>
    %2 = tpu.matmul %0, %1, %cst {dimension_numbers = #tpu.dot_dimension_numbers<[1], [0], [0], [1], [0, 0, 1, 1], [], []>} : vector<128x128xbf16>, vector<128x128xbf16>, vector<128x128xf32> -> vector<128x128xf32>
    %c0_3 = arith.constant 0 : index
    %c0_4 = arith.constant 0 : index
    %3 = vector.load %arg3[%c0_3, %c0_4] : memref<128x128xf32, #tpu.memory_space<vmem>>, vector<128x128xf32>
    tpu.vector_store %arg3[%c0_3, %c0_4], %2 {strides = array<i32>} : memref<128x128xf32, #tpu.memory_space<vmem>>, vector<128x128xf32>,
    %cst_5 = arith.constant dense<0.000000e+00> : vector<128xf32>
    %4 = vector.multi_reduction <add>, %2, %cst_5 [0] : vector<128x128xf32> to vector<128xf32>
    %5 = vector.shape_cast %4 : vector<128xf32> to vector<1x128xf32>
    %6 = arith.mulf %2, %2 : vector<128x128xf32>
    %cst_6 = arith.constant dense<0.000000e+00> : vector<128xf32>
    %7 = vector.multi_reduction <add>, %6, %cst_6 [0] : vector<128x128xf32> to vector<128xf32>
    %8 = vector.shape_cast %7 : vector<128xf32> to vector<1x128xf32>
    %9 = vector.shape_cast %5 : vector<1x128xf32> to vector<1x1x128xf32>
    %10 = vector.shape_cast %9 : vector<1x1x128xf32> to vector<1x1x128xf32>
    %11 = vector.broadcast %10 : vector<1x1x128xf32> to vector<1x8x128xf32>
    %c0_7 = arith.constant 0 : index
    %c0_8 = arith.constant 0 : index
    %c0_9 = arith.constant 0 : index
    %12 = vector.load %arg4[%c0_7, %c0_8, %c0_9] : memref<1x8x128xf32, #tpu.memory_space<vmem>>, vector<1x8x128xf32>
    tpu.vector_store %arg4[%c0_7, %c0_8, %c0_9], %11 {strides = array<i32>} : memref<1x8x128xf32, #tpu.memory_space<vmem>>, vector<1x8x128xf32>,
    %13 = vector.shape_cast %8 : vector<1x128xf32> to vector<1x1x128xf32>
    %14 = vector.shape_cast %13 : vector<1x1x128xf32> to vector<1x1x128xf32>
    %15 = vector.broadcast %14 : vector<1x1x128xf32> to vector<1x8x128xf32>
    %c0_10 = arith.constant 0 : index
    %c0_11 = arith.constant 0 : index
    %c0_12 = arith.constant 0 : index
    %16 = vector.load %arg5[%c0_10, %c0_11, %c0_12] : memref<1x8x128xf32, #tpu.memory_space<vmem>>, vector<1x8x128xf32>
    tpu.vector_store %arg5[%c0_10, %c0_11, %c0_12], %15 {strides = array<i32>} : memref<1x8x128xf32, #tpu.memory_space<vmem>>, vector<1x8x128xf32>,
    return
  }
  func.func @transform_0(%arg0: i32) -> (i32, i32) {
    %c0_i32 = arith.constant 0 : i32
    %c0_i32_0 = arith.constant 0 : i32
    return %arg0, %c0_i32 : i32, i32
  }
  func.func @transform_1(%arg0: i32) -> (i32, i32) {
    %c0_i32 = arith.constant 0 : i32
    %c0_i32_0 = arith.constant 0 : i32
    %c0_i32_1 = arith.constant 0 : i32
    return %c0_i32, %c0_i32_0 : i32, i32
  }
  func.func @transform_2(%arg0: i32) -> (i32, i32) {
    %c0_i32 = arith.constant 0 : i32
    %c0_i32_0 = arith.constant 0 : i32
    return %arg0, %c0_i32 : i32, i32
  }
  func.func @transform_3(%arg0: i32) -> (i32, i32, i32) {
    %c0_i32 = arith.constant 0 : i32
    %c0_i32_0 = arith.constant 0 : i32
    %c0_i32_1 = arith.constant 0 : i32
    return %arg0, %c0_i32, %c0_i32_0 : i32, i32, i32
  }
  func.func @transform_4(%arg0: i32) -> (i32, i32, i32) {
    %c0_i32 = arith.constant 0 : i32
    %c0_i32_0 = arith.constant 0 : i32
    %c0_i32_1 = arith.constant 0 : i32
    return %arg0, %c0_i32, %c0_i32_0 : i32, i32, i32
  }
}

module attributes {stable_mosaic.version = 11 : i64} {
  func.func @_bn_lrelu_kernel(%arg0: i32, %arg1: memref<128x128xf32, #tpu.memory_space<vmem>>, %arg2: memref<1x128xf32, #tpu.memory_space<vmem>>, %arg3: memref<1x128xf32, #tpu.memory_space<vmem>>, %arg4: memref<128x128xf32, #tpu.memory_space<vmem>>) attributes {dimension_semantics = [#tpu.dimension_semantics<parallel>], iteration_bounds = array<i64: 1>, scalar_prefetch = 0 : i64, scratch_operands = 0 : i64, tpu.core_type = #tpu.core_type<tc>, window_params = [{transform_indices = @transform_0, window_bounds = array<i64: 128, 128>}, {pipeline_mode = #tpu.pipeline_mode<synchronous>, transform_indices = @transform_1, window_bounds = array<i64: 1, 128>}, {pipeline_mode = #tpu.pipeline_mode<synchronous>, transform_indices = @transform_2, window_bounds = array<i64: 1, 128>}, {transform_indices = @transform_3, window_bounds = array<i64: 128, 128>}]} {
    %c0 = arith.constant 0 : index
    %c0_0 = arith.constant 0 : index
    %0 = vector.load %arg1[%c0, %c0_0] : memref<128x128xf32, #tpu.memory_space<vmem>>, vector<128x128xf32>
    %c0_1 = arith.constant 0 : index
    %c0_2 = arith.constant 0 : index
    %1 = vector.load %arg2[%c0_1, %c0_2] : memref<1x128xf32, #tpu.memory_space<vmem>>, vector<1x128xf32>
    %2 = vector.broadcast %1 : vector<1x128xf32> to vector<128x128xf32>
    %3 = arith.mulf %0, %2 : vector<128x128xf32>
    %c0_3 = arith.constant 0 : index
    %c0_4 = arith.constant 0 : index
    %4 = vector.load %arg3[%c0_3, %c0_4] : memref<1x128xf32, #tpu.memory_space<vmem>>, vector<1x128xf32>
    %5 = vector.broadcast %4 : vector<1x128xf32> to vector<128x128xf32>
    %6 = arith.addf %3, %5 : vector<128x128xf32>
    %cst = arith.constant 0.000000e+00 : f32
    %7 = vector.broadcast %cst : f32 to vector<128x128xf32>
    %8 = arith.cmpf ogt, %6, %7 : vector<128x128xf32>
    %cst_5 = arith.constant 2.000000e-01 : f32
    %9 = vector.broadcast %cst_5 : f32 to vector<128x128xf32>
    %10 = arith.mulf %9, %6 : vector<128x128xf32>
    %11 = arith.select %8, %6, %10 : vector<128x128xi1>, vector<128x128xf32>
    %c0_6 = arith.constant 0 : index
    %c0_7 = arith.constant 0 : index
    %12 = vector.load %arg4[%c0_6, %c0_7] : memref<128x128xf32, #tpu.memory_space<vmem>>, vector<128x128xf32>
    tpu.vector_store %arg4[%c0_6, %c0_7], %11 {strides = array<i32>} : memref<128x128xf32, #tpu.memory_space<vmem>>, vector<128x128xf32>,
    return
  }
  func.func @transform_0(%arg0: i32) -> (i32, i32) {
    %c0_i32 = arith.constant 0 : i32
    %c0_i32_0 = arith.constant 0 : i32
    return %arg0, %c0_i32 : i32, i32
  }
  func.func @transform_1(%arg0: i32) -> (i32, i32) {
    %c0_i32 = arith.constant 0 : i32
    %c0_i32_0 = arith.constant 0 : i32
    %c0_i32_1 = arith.constant 0 : i32
    return %c0_i32, %c0_i32_0 : i32, i32
  }
  func.func @transform_2(%arg0: i32) -> (i32, i32) {
    %c0_i32 = arith.constant 0 : i32
    %c0_i32_0 = arith.constant 0 : i32
    %c0_i32_1 = arith.constant 0 : i32
    return %c0_i32, %c0_i32_0 : i32, i32
  }
  func.func @transform_3(%arg0: i32) -> (i32, i32) {
    %c0_i32 = arith.constant 0 : i32
    %c0_i32_0 = arith.constant 0 : i32
    return %arg0, %c0_i32 : i32, i32
  }
}

</mosaic_0001>

<llo_original>
// kernel: unet_down_forward.3
$region0: #{unet_down_forward.3}
  #allocation0 [shape = 'u32[]', space=smem, size = 0x4, offset = 0x4, fixed_abs, tag = 'smem constant byte address 0x4 - core index']
  #allocation1 [shape = 'u32[144,128]{1,0:T(1,128)}', space=vmem, size = 0x12000, scoped, tag = 'internal scratch']
  %s0 = inlined_call_operand.vmem [shape: f32[128,128], index: 0, kind: input, shape index: {}, may-alias: {0,3}]
  %s1 = inlined_call_operand.vmem [shape: f32[1,128], index: 1, kind: input, shape index: {}]
  %s2 = inlined_call_operand.vmem [shape: f32[1,128], index: 2, kind: input, shape index: {}]
  %s3 = inlined_call_operand.vmem [shape: f32[128,128], index: 3, kind: output, shape index: {}, may-alias: {0,3}]
  %s4 = sld [smem:[#allocation0]]
  $region22: #{unet_down_forward.3} parent=0
    _
  %s6 = ssub.s32 1, %s4
  %s7 = scalar_select 0, %s6, %s4
  // Predicated region
  $region2: #{unet_down_forward.3} parent=0 // pred_check
    _
  $region3: #{unet_down_forward.3} parent=0 // pred_check_branch
    %9 = sbr.rel (0) target = $region5
  $region4: #{unet_down_forward.3} parent=0 // pred_region
    _
  $region5: #{unet_down_forward.3} parent=0 // pred_fallthru
    _
  // Predicated region
  $region6: #{unet_down_forward.3} parent=0 // pred_check
    _
  $region7: #{unet_down_forward.3} parent=0 // pred_check_branch
    %11 = sbr.rel (0) target = $region9
  $region8: #{unet_down_forward.3} parent=0 // pred_region
    _
  $region9: #{unet_down_forward.3} parent=0 // pred_fallthru
    _
  // Predicated region
  $region10: #{unet_down_forward.3} parent=0 // pred_check
    _
  $region11: #{unet_down_forward.3} parent=0 // pred_check_branch
    %13 = sbr.rel (0) target = $region13
  $region12: #{unet_down_forward.3} parent=0 // pred_region
    _
  $region13: #{unet_down_forward.3} parent=0 // pred_fallthru
    _
  %v14 = vld [vmem:[%s0] sm:$0xff]
  %v15 = vld [vmem:[%s0 + $0x8] sm:$0xff]
  %v16 = vld [vmem:[%s0 + $0x10] sm:$0xff]
  %v17 = vld [vmem:[%s0 + $0x18] sm:$0xff]
  %v18 = vld [vmem:[%s0 + $0x20] sm:$0xff]
  %v19 = vld [vmem:[%s0 + $0x28] sm:$0xff]
  %v20 = vld [vmem:[%s0 + $0x30] sm:$0xff]
  %v21 = vld [vmem:[%s0 + $0x38] sm:$0xff]
  %v22 = vld [vmem:[%s0 + $0x40] sm:$0xff]
  %v23 = vld [vmem:[%s0 + $0x48] sm:$0xff]
  %v24 = vld [vmem:[%s0 + $0x50] sm:$0xff]
  %v25 = vld [vmem:[%s0 + $0x58] sm:$0xff]
  %v26 = vld [vmem:[%s0 + $0x60] sm:$0xff]
  %v27 = vld [vmem:[%s0 + $0x68] sm:$0xff]
  %v28 = vld [vmem:[%s0 + $0x70] sm:$0xff]
  %v29 = vld [vmem:[%s0 + $0x78] sm:$0xff]
  %v30 = vld [vmem:[%s1] sm:$0x1]
  %v32 = vlaneseq
  %v33 = vshrl.u32 %v32, 7
  %v34 = vsub.s32 0, %v33
  %v35 = vrot.slane %v30, %v34
  %v37 = vmul.f32 %v14, %v35
  %v38 = vmul.f32 %v15, %v35
  %v39 = vmul.f32 %v16, %v35
  %v40 = vmul.f32 %v17, %v35
  %v41 = vmul.f32 %v18, %v35
  %v42 = vmul.f32 %v19, %v35
  %v43 = vmul.f32 %v20, %v35
  %v44 = vmul.f32 %v21, %v35
  %v45 = vmul.f32 %v22, %v35
  %v46 = vmul.f32 %v23, %v35
  %v47 = vmul.f32 %v24, %v35
  %v48 = vmul.f32 %v25, %v35
  %v49 = vmul.f32 %v26, %v35
  %v50 = vmul.f32 %v27, %v35
  %v51 = vmul.f32 %v28, %v35
  %v52 = vmul.f32 %v29, %v35
  %v53 = vld [vmem:[%s2] sm:$0x1]
  %v55 = vlaneseq
  %v56 = vshrl.u32 %v55, 7
  %v57 = vsub.s32 0, %v56
  %v58 = vrot.slane %v53, %v57
  %v60 = vadd.f32 %v37, %v58
  %v61 = vadd.f32 %v38, %v58
  %v62 = vadd.f32 %v39, %v58
  %v63 = vadd.f32 %v40, %v58
  %v64 = vadd.f32 %v41, %v58
  %v65 = vadd.f32 %v42, %v58
  %v66 = vadd.f32 %v43, %v58
  %v67 = vadd.f32 %v44, %v58
  %v68 = vadd.f32 %v45, %v58
  %v69 = vadd.f32 %v46, %v58
  %v70 = vadd.f32 %v47, %v58
  %v71 = vadd.f32 %v48, %v58
  %v72 = vadd.f32 %v49, %v58
  %v73 = vadd.f32 %v50, %v58
  %v74 = vadd.f32 %v51, %v58
  %v75 = vadd.f32 %v52, %v58
  %vm76 = vcmp.gt.f32.partialorder %v60, 0.0
  %vm77 = vcmp.gt.f32.partialorder %v61, 0.0
  %vm78 = vcmp.gt.f32.partialorder %v62, 0.0
  %vm79 = vcmp.gt.f32.partialorder %v63, 0.0
  %vm80 = vcmp.gt.f32.partialorder %v64, 0.0
  %vm81 = vcmp.gt.f32.partialorder %v65, 0.0
  %vm82 = vcmp.gt.f32.partialorder %v66, 0.0
  %vm83 = vcmp.gt.f32.partialorder %v67, 0.0
  %vm84 = vcmp.gt.f32.partialorder %v68, 0.0
  %vm85 = vcmp.gt.f32.partialorder %v69, 0.0
  %vm86 = vcmp.gt.f32.partialorder %v70, 0.0
  %vm87 = vcmp.gt.f32.partialorder %v71, 0.0
  %vm88 = vcmp.gt.f32.partialorder %v72, 0.0
  %vm89 = vcmp.gt.f32.partialorder %v73, 0.0
  %vm90 = vcmp.gt.f32.partialorder %v74, 0.0
  %vm91 = vcmp.gt.f32.partialorder %v75, 0.0
  %v92 = vmul.f32 %v60, 0.2
  %v93 = vmul.f32 %v61, 0.2
  %v94 = vmul.f32 %v62, 0.2
  %v95 = vmul.f32 %v63, 0.2
  %v96 = vmul.f32 %v64, 0.2
  %v97 = vmul.f32 %v65, 0.2
  %v98 = vmul.f32 %v66, 0.2
  %v99 = vmul.f32 %v67, 0.2
  %v100 = vmul.f32 %v68, 0.2
  %v101 = vmul.f32 %v69, 0.2
  %v102 = vmul.f32 %v70, 0.2
  %v103 = vmul.f32 %v71, 0.2
  %v104 = vmul.f32 %v72, 0.2
  %v105 = vmul.f32 %v73, 0.2
  %v106 = vmul.f32 %v74, 0.2
  %v107 = vmul.f32 %v75, 0.2
  %v108 = vsel %vm76, %v60, %v92
  %v109 = vsel %vm77, %v61, %v93
  %v110 = vsel %vm78, %v62, %v94
  %v111 = vsel %vm79, %v63, %v95
  %v112 = vsel %vm80, %v64, %v96
  %v113 = vsel %vm81, %v65, %v97
  %v114 = vsel %vm82, %v66, %v98
  %v115 = vsel %vm83, %v67, %v99
  %v116 = vsel %vm84, %v68, %v100
  %v117 = vsel %vm85, %v69, %v101
  %v118 = vsel %vm86, %v70, %v102
  %v119 = vsel %vm87, %v71, %v103
  %v120 = vsel %vm88, %v72, %v104
  %v121 = vsel %vm89, %v73, %v105
  %v122 = vsel %vm90, %v74, %v106
  %v123 = vsel %vm91, %v75, %v107
  %124 = vst [vmem:[%s3] sm:$0xff] %v108
  %125 = vst [vmem:[%s3 + $0x8] sm:$0xff] %v109
  %126 = vst [vmem:[%s3 + $0x10] sm:$0xff] %v110
  %127 = vst [vmem:[%s3 + $0x18] sm:$0xff] %v111
  %128 = vst [vmem:[%s3 + $0x20] sm:$0xff] %v112
  %129 = vst [vmem:[%s3 + $0x28] sm:$0xff] %v113
  %130 = vst [vmem:[%s3 + $0x30] sm:$0xff] %v114
  %131 = vst [vmem:[%s3 + $0x38] sm:$0xff] %v115
  %132 = vst [vmem:[%s3 + $0x40] sm:$0xff] %v116
  %133 = vst [vmem:[%s3 + $0x48] sm:$0xff] %v117
  %134 = vst [vmem:[%s3 + $0x50] sm:$0xff] %v118
  %135 = vst [vmem:[%s3 + $0x58] sm:$0xff] %v119
  %136 = vst [vmem:[%s3 + $0x60] sm:$0xff] %v120
  %137 = vst [vmem:[%s3 + $0x68] sm:$0xff] %v121
  %138 = vst [vmem:[%s3 + $0x70] sm:$0xff] %v122
  %139 = vst [vmem:[%s3 + $0x78] sm:$0xff] %v123
  // Predicated region
  $region14: #{unet_down_forward.3} parent=0 // pred_check
    _
  $region15: #{unet_down_forward.3} parent=0 // pred_check_branch
    %141 = sbr.rel (0) target = $region17
  $region16: #{unet_down_forward.3} parent=0 // pred_region
    _
  $region17: #{unet_down_forward.3} parent=0 // pred_fallthru
    _
  // Predicated region
  $region18: #{unet_down_forward.3} parent=0 // pred_check
    _
  $region19: #{unet_down_forward.3} parent=0 // pred_check_branch
    %143 = sbr.rel (0) target = $region21
  $region20: #{unet_down_forward.3} parent=0 // pred_region
    _
  $region21: #{unet_down_forward.3} parent=0 // pred_fallthru
    _

// kernel: unet_down_forward.2
$region0: #{unet_down_forward.2}
  #allocation0 [shape = 'u32[]', space=smem, size = 0x4, offset = 0x4, fixed_abs, tag = 'smem constant byte address 0x4 - core index']
  #allocation1 [shape = 'u32[144,128]{1,0:T(1,128)}', space=vmem, size = 0x12000, scoped, tag = 'internal scratch']
  %s0 = inlined_call_operand.vmem [shape: bf16[128,128], index: 0, kind: input, shape index: {}]
  %s1 = inlined_call_operand.vmem [shape: bf16[128,128], index: 1, kind: input, shape index: {}]
  %s2 = inlined_call_operand.vmem [shape: f32[128,128], index: 2, kind: output, shape index: {0}]
  %s3 = inlined_call_operand.vmem [shape: f32[1,8,128], index: 3, kind: output, shape index: {1}]
  %s4 = inlined_call_operand.vmem [shape: f32[1,8,128], index: 4, kind: output, shape index: {2}]
  %5 = xla_tuple %s2, %s3, %s4
  %s6 = sld [smem:[#allocation0]]
  $region34: #{unet_down_forward.2} parent=0
    _
  %s8 = ssub.s32 1, %s6
  %s9 = scalar_select 0, %s8, %s6
  // Predicated region
  $region2: #{unet_down_forward.2} parent=0 // pred_check
    _
  $region3: #{unet_down_forward.2} parent=0 // pred_check_branch
    %11 = sbr.rel (0) target = $region5
  $region4: #{unet_down_forward.2} parent=0 // pred_region
    _
  $region5: #{unet_down_forward.2} parent=0 // pred_fallthru
    _
  // Predicated region
  $region6: #{unet_down_forward.2} parent=0 // pred_check
    _
  $region7: #{unet_down_forward.2} parent=0 // pred_check_branch
    %13 = sbr.rel (0) target = $region9
  $region8: #{unet_down_forward.2} parent=0 // pred_region
    _
  $region9: #{unet_down_forward.2} parent=0 // pred_fallthru
    _
  %v15 = vld [vmem:[%s0] sm:$0xf]
  %v16 = vld [vmem:[%s0 + $0x4] sm:$0xf]
  %v17 = vld [vmem:[%s0 + $0x8] sm:$0xf]
  %v18 = vld [vmem:[%s0 + $0xc] sm:$0xf]
  %v19 = vld [vmem:[%s0 + $0x10] sm:$0xf]
  %v20 = vld [vmem:[%s0 + $0x14] sm:$0xf]
  %v21 = vld [vmem:[%s0 + $0x18] sm:$0xf]
  %v22 = vld [vmem:[%s0 + $0x1c] sm:$0xf]
  %v23 = vld [vmem:[%s0 + $0x20] sm:$0xf]
  %v24 = vld [vmem:[%s0 + $0x24] sm:$0xf]
  %v25 = vld [vmem:[%s0 + $0x28] sm:$0xf]
  %v26 = vld [vmem:[%s0 + $0x2c] sm:$0xf]
  %v27 = vld [vmem:[%s0 + $0x30] sm:$0xf]
  %v28 = vld [vmem:[%s0 + $0x34] sm:$0xf]
  %v29 = vld [vmem:[%s0 + $0x38] sm:$0xf]
  %v30 = vld [vmem:[%s0 + $0x3c] sm:$0xf]
  %v31 = vld [vmem:[%s1] sm:$0xf]
  %v32 = vld [vmem:[%s1 + $0x4] sm:$0xf]
  %v33 = vld [vmem:[%s1 + $0x8] sm:$0xf]
  %v34 = vld [vmem:[%s1 + $0xc] sm:$0xf]
  %v35 = vld [vmem:[%s1 + $0x10] sm:$0xf]
  %v36 = vld [vmem:[%s1 + $0x14] sm:$0xf]
  %v37 = vld [vmem:[%s1 + $0x18] sm:$0xf]
  %v38 = vld [vmem:[%s1 + $0x1c] sm:$0xf]
  %v39 = vld [vmem:[%s1 + $0x20] sm:$0xf]
  %v40 = vld [vmem:[%s1 + $0x24] sm:$0xf]
  %v41 = vld [vmem:[%s1 + $0x28] sm:$0xf]
  %v42 = vld [vmem:[%s1 + $0x2c] sm:$0xf]
  %v43 = vld [vmem:[%s1 + $0x30] sm:$0xf]
  %v44 = vld [vmem:[%s1 + $0x34] sm:$0xf]
  %v45 = vld [vmem:[%s1 + $0x38] sm:$0xf]
  %v46 = vld [vmem:[%s1 + $0x3c] sm:$0xf]
  %v63 = vunpack.c.l.b16 %v15
  %v64 = vunpack.c.l.b16 %v16
  %v65 = vunpack.c.l.b16 %v17
  %v66 = vunpack.c.l.b16 %v18
  %v67 = vunpack.c.l.b16 %v19
  %v68 = vunpack.c.l.b16 %v20
  %v69 = vunpack.c.l.b16 %v21
  %v70 = vunpack.c.l.b16 %v22
  %v71 = vunpack.c.l.b16 %v23
  %v72 = vunpack.c.l.b16 %v24
  %v73 = vunpack.c.l.b16 %v25
  %v74 = vunpack.c.l.b16 %v26
  %v75 = vunpack.c.l.b16 %v27
  %v76 = vunpack.c.l.b16 %v28
  %v77 = vunpack.c.l.b16 %v29
  %v78 = vunpack.c.l.b16 %v30
  %v79 = vpack.c.b16 %v64, %v63
  %v80 = vpack.c.b16 %v66, %v65
  %v81 = vpack.c.b16 %v68, %v67
  %v82 = vpack.c.b16 %v70, %v69
  %v83 = vpack.c.b16 %v72, %v71
  %v84 = vpack.c.b16 %v74, %v73
  %v85 = vpack.c.b16 %v76, %v75
  %v86 = vpack.c.b16 %v78, %v77
  %v111 = vunpack.c.l.b16 %v31
  %v112 = vunpack.c.l.b16 %v32
  %v113 = vunpack.c.l.b16 %v33
  %v114 = vunpack.c.l.b16 %v34
  %v115 = vunpack.c.l.b16 %v35
  %v116 = vunpack.c.l.b16 %v36
  %v117 = vunpack.c.l.b16 %v37
  %v118 = vunpack.c.l.b16 %v38
  %v119 = vunpack.c.l.b16 %v39
  %v120 = vunpack.c.l.b16 %v40
  %v121 = vunpack.c.l.b16 %v41
  %v122 = vunpack.c.l.b16 %v42
  %v123 = vunpack.c.l.b16 %v43
  %v124 = vunpack.c.l.b16 %v44
  %v125 = vunpack.c.l.b16 %v45
  %v126 = vunpack.c.l.b16 %v46
  %v127 = vpack.c.b16 %v112, %v111
  %v128 = vpack.c.b16 %v114, %v113
  %v129 = vpack.c.b16 %v116, %v115
  %v130 = vpack.c.b16 %v118, %v117
  %v131 = vpack.c.b16 %v120, %v119
  %v132 = vpack.c.b16 %v122, %v121
  %v133 = vpack.c.b16 %v124, %v123
  %v134 = vpack.c.b16 %v126, %v125
  %143 = vmatprep.subr.bf16.mxu0 0
  %144 = vmatpush1.bf16.msra.mxu0 %v127
  %145 = vmatprep.subr.bf16.mxu0 0
  %146 = vmatpush1.bf16.msra.mxu0 %v128
  %147 = vmatprep.subr.bf16.mxu0 0
  %148 = vmatpush1.bf16.msra.mxu0 %v129
  %149 = vmatprep.subr.bf16.mxu0 0
  %150 = vmatpush1.bf16.msra.mxu0 %v130
  %151 = vmatprep.subr.bf16.mxu0 0
  %152 = vmatpush1.bf16.msra.mxu0 %v131
  %153 = vmatprep.subr.bf16.mxu0 0
  %154 = vmatpush1.bf16.msra.mxu0 %v132
  %155 = vmatprep.subr.bf16.mxu0 0
  %156 = vmatpush1.bf16.msra.mxu0 %v133
  %157 = vmatprep.subr.bf16.mxu0 0
  %158 = vmatpush1.bf16.msra.mxu0 %v134
  %159 = vmatprep.subr.bf16.mxu0 0
  %160 = vmatpush1.bf16.msra.mxu0 0
  %161 = vmatprep.subr.bf16.mxu0 0
  %162 = vmatpush1.bf16.msra.mxu0 0
  %163 = vmatprep.subr.bf16.mxu0 0
  %164 = vmatpush1.bf16.msra.mxu0 0
  %165 = vmatprep.subr.bf16.mxu0 0
  %166 = vmatpush1.bf16.msra.mxu0 0
  %167 = vmatprep.subr.bf16.mxu0 0
  %168 = vmatpush1.bf16.msra.mxu0 0
  %169 = vmatprep.subr.bf16.mxu0 0
  %170 = vmatpush1.bf16.msra.mxu0 0
  %171 = vmatprep.subr.bf16.mxu0 0
  %172 = vmatpush1.bf16.msra.mxu0 0
  %173 = vmatprep.subr.bf16.mxu0 0
  %174 = vmatpush1.bf16.msra.mxu0 0
  %175 = vmatprep.mubr.bf16.mxu0 0
  %176 = vmatmul.mubr.bf16.gmra.mrb[0].mxu0 %v79
  %v177 = vpop.f32.mrb[0].mxu0
  %v178 = vadd.f32 0.0, %v177
  %v179 = vpop.f32.mrb[0].mxu0
  %v180 = vpop.f32.mrb[0].mxu0
  %v181 = vadd.f32 0.0, %v180
  %v182 = vpop.f32.mrb[0].mxu0
  %183 = vmatprep.mubr.bf16.mxu0 0
  %184 = vmatmul.mubr.bf16.gmra.mrb[0].mxu0 %v80
  %v185 = vpop.f32.mrb[0].mxu0
  %v186 = vadd.f32 0.0, %v185
  %v187 = vpop.f32.mrb[0].mxu0
  %v188 = vpop.f32.mrb[0].mxu0
  %v189 = vadd.f32 0.0, %v188
  %v190 = vpop.f32.mrb[0].mxu0
  %191 = vmatprep.mubr.bf16.mxu0 0
  %192 = vmatmul.mubr.bf16.gmra.mrb[0].mxu0 %v81
  %v193 = vpop.f32.mrb[0].mxu0
  %v194 = vadd.f32 0.0, %v193
  %v195 = vpop.f32.mrb[0].mxu0
  %v196 = vpop.f32.mrb[0].mxu0
  %v197 = vadd.f32 0.0, %v196
  %v198 = vpop.f32.mrb[0].mxu0
  %199 = vmatprep.mubr.bf16.mxu0 0
  %200 = vmatmul.mubr.bf16.gmra.mrb[0].mxu0 %v82
  %v201 = vpop.f32.mrb[0].mxu0
  %v202 = vadd.f32 0.0, %v201
  %v203 = vpop.f32.mrb[0].mxu0
  %v204 = vpop.f32.mrb[0].mxu0
  %v205 = vadd.f32 0.0, %v204
  %v206 = vpop.f32.mrb[0].mxu0
  %207 = vmatprep.mubr.bf16.mxu0 0
  %208 = vmatmul.mubr.bf16.gmra.mrb[0].mxu0 %v83
  %v209 = vpop.f32.mrb[0].mxu0
  %v210 = vadd.f32 0.0, %v209
  %v211 = vpop.f32.mrb[0].mxu0
  %v212 = vpop.f32.mrb[0].mxu0
  %v213 = vadd.f32 0.0, %v212
  %v214 = vpop.f32.mrb[0].mxu0
  %215 = vmatprep.mubr.bf16.mxu0 0
  %216 = vmatmul.mubr.bf16.gmra.mrb[0].mxu0 %v84
  %v217 = vpop.f32.mrb[0].mxu0
  %v218 = vadd.f32 0.0, %v217
  %v219 = vpop.f32.mrb[0].mxu0
  %v220 = vpop.f32.mrb[0].mxu0
  %v221 = vadd.f32 0.0, %v220
  %v222 = vpop.f32.mrb[0].mxu0
  %223 = vmatprep.mubr.bf16.mxu0 0
  %224 = vmatmul.mubr.bf16.gmra.mrb[0].mxu0 %v85
  %v225 = vpop.f32.mrb[0].mxu0
  %v226 = vadd.f32 0.0, %v225
  %v227 = vpop.f32.mrb[0].mxu0
  %v228 = vpop.f32.mrb[0].mxu0
  %v229 = vadd.f32 0.0, %v228
  %v230 = vpop.f32.mrb[0].mxu0
  %231 = vmatprep.mubr.bf16.mxu0 0
  %232 = vmatmul.mubr.bf16.gmra.mrb[0].mxu0 %v86
  %v233 = vpop.f32.mrb[0].mxu0
  %v234 = vadd.f32 0.0, %v233
  %v235 = vpop.f32.mrb[0].mxu0
  %v236 = vpop.f32.mrb[0].mxu0
  %v237 = vadd.f32 0.0, %v236
  %v238 = vpop.f32.mrb[0].mxu0
  %239 = vdwg.mxu0
  %240 = vst [vmem:[%s2] sm:$0xff] %v178
  %241 = vst [vmem:[%s2 + $0x8] sm:$0xff] %v181
  %242 = vst [vmem:[%s2 + $0x10] sm:$0xff] %v186
  %243 = vst [vmem:[%s2 + $0x18] sm:$0xff] %v189
  %244 = vst [vmem:[%s2 + $0x20] sm:$0xff] %v194
  %245 = vst [vmem:[%s2 + $0x28] sm:$0xff] %v197
  %246 = vst [vmem:[%s2 + $0x30] sm:$0xff] %v202
  %247 = vst [vmem:[%s2 + $0x38] sm:$0xff] %v205
  %248 = vst [vmem:[%s2 + $0x40] sm:$0xff] %v210
  %249 = vst [vmem:[%s2 + $0x48] sm:$0xff] %v213
  %250 = vst [vmem:[%s2 + $0x50] sm:$0xff] %v218
  %251 = vst [vmem:[%s2 + $0x58] sm:$0xff] %v221
  %252 = vst [vmem:[%s2 + $0x60] sm:$0xff] %v226
  %253 = vst [vmem:[%s2 + $0x68] sm:$0xff] %v229
  %254 = vst [vmem:[%s2 + $0x70] sm:$0xff] %v234
  %255 = vst [vmem:[%s2 + $0x78] sm:$0xff] %v237
  %v256 = vadd.f32 %v178, %v181
  %v257 = vadd.f32 %v256, %v186
  %v258 = vadd.f32 %v257, %v189
  %v259 = vadd.f32 %v258, %v194
  %v260 = vadd.f32 %v259, %v197
  %v261 = vadd.f32 %v260, %v202
  %v262 = vadd.f32 %v261, %v205
  %v263 = vadd.f32 %v262, %v210
  %v264 = vadd.f32 %v263, %v213
  %v265 = vadd.f32 %v264, %v218
  %v266 = vadd.f32 %v265, %v221
  %v267 = vadd.f32 %v266, %v226
  %v268 = vadd.f32 %v267, %v229
  %v269 = vadd.f32 %v268, %v234
  %v270 = vadd.f32 %v269, %v237
  %v271 = vrot.slane %v270, 4
  %v272 = vadd.f32 %v270, %v271
  %v273 = vrot.slane %v272, 2
  %v274 = vadd.f32 %v272, %v273
  %v275 = vrot.slane %v274, 1
  %v276 = vadd.f32 %v274, %v275
  %v277 = vmul.f32 %v178, %v178
  %v278 = vmul.f32 %v181, %v181
  %v279 = vmul.f32 %v186, %v186
  %v280 = vmul.f32 %v189, %v189
  %v281 = vmul.f32 %v194, %v194
  %v282 = vmul.f32 %v197, %v197
  %v283 = vmul.f32 %v202, %v202
  %v284 = vmul.f32 %v205, %v205
  %v285 = vmul.f32 %v210, %v210
  %v286 = vmul.f32 %v213, %v213
  %v287 = vmul.f32 %v218, %v218
  %v288 = vmul.f32 %v221, %v221
  %v289 = vmul.f32 %v226, %v226
  %v290 = vmul.f32 %v229, %v229
  %v291 = vmul.f32 %v234, %v234
  %v292 = vmul.f32 %v237, %v237
  %v293 = vadd.f32 %v277, %v278
  %v294 = vadd.f32 %v293, %v279
  %v295 = vadd.f32 %v294, %v280
  %v296 = vadd.f32 %v295, %v281
  %v297 = vadd.f32 %v296, %v282
  %v298 = vadd.f32 %v297, %v283
  %v299 = vadd.f32 %v298, %v284
  %v300 = vadd.f32 %v299, %v285
  %v301 = vadd.f32 %v300, %v286
  %v302 = vadd.f32 %v301, %v287
  %v303 = vadd.f32 %v302, %v288
  %v304 = vadd.f32 %v303, %v289
  %v305 = vadd.f32 %v304, %v290
  %v306 = vadd.f32 %v305, %v291
  %v307 = vadd.f32 %v306, %v292
  %v308 = vrot.slane %v307, 4
  %v309 = vadd.f32 %v307, %v308
  %v310 = vrot.slane %v309, 2
  %v311 = vadd.f32 %v309, %v310
  %v312 = vrot.slane %v311, 1
  %v313 = vadd.f32 %v311, %v312
  %314 = vst [vmem:[%s3] sm:$0xff] %v276
  %315 = vst [vmem:[%s4] sm:$0xff] %v313
  // Predicated region
  $region10: #{unet_down_forward.2} parent=0 // pred_check
    _
  $region11: #{unet_down_forward.2} parent=0 // pred_check_branch
    %317 = sbr.rel (0) target = $region13
  $region12: #{unet_down_forward.2} parent=0 // pred_region
    _
  $region13: #{unet_down_forward.2} parent=0 // pred_fallthru
    _
  // Predicated region
  $region14: #{unet_down_forward.2} parent=0 // pred_check
    _
  $region15: #{unet_down_forward.2} parent=0 // pred_check_branch
    %319 = sbr.rel (0) target = $region17
  $region16: #{unet_down_forward.2} parent=0 // pred_region
    _
  $region17: #{unet_down_forward.2} parent=0 // pred_fallthru
    _
  // Predicated region
  $region18: #{unet_down_forward.2} parent=0 // pred_check
    _
  $region19: #{unet_down_forward.2} parent=0 // pred_check_branch
    %321 = sbr.rel (0) target = $region21
  $region20: #{unet_down_forward.2} parent=0 // pred_region
    _
  $region21: #{unet_down_forward.2} parent=0 // pred_fallthru
    _
  // Predicated region
  $region22: #{unet_down_forward.2} parent=0 // pred_check
    _
  $region23: #{unet_down_forward.2} parent=0 // pred_check_branch
    %323 = sbr.rel (0) target = $region25
  $region24: #{unet_down_forward.2} parent=0 // pred_region
    _
  $region25: #{unet_down_forward.2} parent=0 // pred_fallthru
    _
  // Predicated region
  $region26: #{unet_down_forward.2} parent=0 // pred_check
    _
  $region27: #{unet_down_forward.2} parent=0 // pred_check_branch
    %325 = sbr.rel (0) target = $region29
  $region28: #{unet_down_forward.2} parent=0 // pred_region
    _
  $region29: #{unet_down_forward.2} parent=0 // pred_fallthru
    _
  // Predicated region
  $region30: #{unet_down_forward.2} parent=0 // pred_check
    _
  $region31: #{unet_down_forward.2} parent=0 // pred_check_branch
    %327 = sbr.rel (0) target = $region33
  $region32: #{unet_down_forward.2} parent=0 // pred_region
    _
  $region33: #{unet_down_forward.2} parent=0 // pred_fallthru
    _

</llo_original>
